<compile_context>
chip_gen: v6e
topology: v6e:2x2x1
jax: 0.10.0
libtpu: 0.0.40
codegen_flags: <defaults>
</compile_context>

<pallas_src>
import functools

import jax
import jax.numpy as jnp
from jax import lax
from jax.experimental import pallas as pl
from jax.experimental.pallas import tpu as pltpu

NUM_FEATURES = 34      # len(INPUT_FEATURES)
HIDDEN = 200
NUM_CLASSES = 5
BN_EPS = 1e-5

HID_PAD = 256          # 200 padded to 2*128 lanes (zero-padded weight cols/rows)
OUT_PAD = 128          # 5 classes padded to one full lane group
VMEM_LIMIT_BYTES = 32 * 1024 * 1024


def _round_up(x, m):
    return (x + m - 1) // m * m


# ---------------------------------------------------------------------------
# In-kernel helpers
# ---------------------------------------------------------------------------
def _reduce_packed_stats(st, n_valid):
    """Packed per-tile stats (n_tiles*8, D): s in sublanes 0-3, ss in 4-7
    -> whole-batch (1, D) mean and inv-std (biased variance, like PyTorch
    training-mode BatchNorm)."""
    row = lax.broadcasted_iota(jnp.int32, st.shape, 0)
    s_tot = jnp.sum(jnp.where(row % 8 == 0, st, 0.0), axis=0, keepdims=True)
    ss_tot = jnp.sum(jnp.where(row % 8 == 4, st, 0.0), axis=0, keepdims=True)
    mean = s_tot / n_valid
    var = jnp.maximum(ss_tot / n_valid - mean * mean, 0.0)
    return mean, lax.rsqrt(var + BN_EPS)


# ---------------------------------------------------------------------------
# Kernels
# ---------------------------------------------------------------------------
def _hidden_stage_kernel(n_valid, tb, need_mask, normalize, *refs):
    """One hidden stage (Linear + Tanh) on one batch tile.

    If `normalize`, the incoming pre-BN activation is first normalized with
    the previous layer's whole-batch statistics, reduced in-kernel from the
    packed per-tile partials (the BN affine is already folded into W / b).
    Emits this layer's pre-BN activation in bf16 plus one packed (8, D_out)
    f32 block of per-tile BN partials (sum in sublanes 0-3, sumsq in 4-7).
    """
    if normalize:
        a_ref, stats_ref, w_ref, b_ref, h_ref, st_ref = refs
    else:
        a_ref, w_ref, b_ref, h_ref, st_ref = refs

    a = a_ref[...].astype(jnp.float32)                      # (TB, D_in)
    if normalize:
        mean, inv = _reduce_packed_stats(stats_ref[...], n_valid)
        a = (a - mean) * inv

    y = jnp.dot(a.astype(jnp.bfloat16), w_ref[...],
                preferred_element_type=jnp.float32) + b_ref[...]
    y = jnp.tanh(y)                                         # (TB, D_out) f32
    h_ref[...] = y.astype(h_ref.dtype)                      # bf16 store

    # Per-tile partial BN stats in f32. Rows beyond the real batch size are
    # masked out only when padding exists (trace-time special case).
    if need_mask:
        r = pl.program_id(0) * tb + lax.broadcasted_iota(jnp.int32, (tb, 1), 0)
        ym = jnp.where(r < n_valid, y, 0.0)
    else:
        ym = y
    s = jnp.sum(ym, axis=0, keepdims=True)                  # (1, D_out)
    ss = jnp.sum(ym * ym, axis=0, keepdims=True)            # (1, D_out)
    d_out = y.shape[1]
    sub = lax.broadcasted_iota(jnp.int32, (8, d_out), 0)
    st_ref[...] = jnp.where(sub < 4,
                            jnp.broadcast_to(s, (8, d_out)),
                            jnp.broadcast_to(ss, (8, d_out)))


def _final_stage_kernel(n_valid, a_ref, stats_ref, w_ref, b_ref, o_ref):
    """Normalize with layer-3 BN stats (reduced in-kernel from packed
    partials), run the final Linear (output padded to 128 lanes)."""
    mean, inv = _reduce_packed_stats(stats_ref[...], n_valid)
    xn = (a_ref[...].astype(jnp.float32) - mean) * inv
    o_ref[...] = (jnp.dot(xn.astype(jnp.bfloat16), w_ref[...],
                          preferred_element_type=jnp.float32)
                  + b_ref[...]).astype(o_ref.dtype)


def _fused_kernel(x_ref, w1_ref, b1_ref, w2_ref, b2_ref, w3_ref, b3_ref,
                  w4_ref, b4_ref, o_ref):
    """Entire forward in one kernel; activations never leave VMEM.
    No batch padding is used, so exact whole-batch BN stats need no masking."""
    h = x_ref[...].astype(jnp.float32)
    n = h.shape[0]
    for w_ref, b_ref in ((w1_ref, b1_ref), (w2_ref, b2_ref), (w3_ref, b3_ref)):
        y = jnp.tanh(jnp.dot(h.astype(jnp.bfloat16), w_ref[...],
                             preferred_element_type=jnp.float32) + b_ref[...])
        mean = jnp.sum(y, axis=0, keepdims=True) / n
        var = jnp.maximum(jnp.sum(y * y, axis=0, keepdims=True) / n
                          - mean * mean, 0.0)
        h = (y - mean) * lax.rsqrt(var + BN_EPS)
    o_ref[...] = (jnp.dot(h.astype(jnp.bfloat16), w4_ref[...],
                          preferred_element_type=jnp.float32)
                  + b4_ref[...]).astype(o_ref.dtype)


# ---------------------------------------------------------------------------
# Parameter prep: fold BN affine into the next Linear, pad, cast weights bf16
# ---------------------------------------------------------------------------
def prepare_params(params):
    w1, b1 = params["w1"], params["b1"]
    # BN_k affine folds into Linear_{k+1}:  W' = g[:,None]*W,  b' = be @ W + b
    w2 = params["g1"].reshape(-1, 1) * params["w2"]
    b2 = params["be1"] @ params["w2"] + params["b2"]
    w3 = params["g2"].reshape(-1, 1) * params["w3"]
    b3 = params["be2"] @ params["w3"] + params["b3"]
    w4 = params["g3"].reshape(-1, 1) * params["w4"]
    b4 = params["be3"] @ params["w4"] + params["b4"]

    def padw(w, rows, cols):
        return jnp.pad(w, ((0, rows - w.shape[0]),
                           (0, cols - w.shape[1]))).astype(jnp.bfloat16)

    def padb(b, cols):
        return jnp.pad(b, ((0, 0), (0, cols - b.shape[1]))).astype(jnp.float32)

    return {
        "w": [padw(w1, NUM_FEATURES, HID_PAD), padw(w2, HID_PAD, HID_PAD),
              padw(w3, HID_PAD, HID_PAD), padw(w4, HID_PAD, OUT_PAD)],
        "b": [padb(b1, HID_PAD), padb(b2, HID_PAD),
              padb(b3, HID_PAD), padb(b4, OUT_PAD)],
    }


# ---------------------------------------------------------------------------
# Forward paths
# ---------------------------------------------------------------------------
def _forward_fused(x, prep):
    B = x.shape[0]
    w, b = prep["w"], prep["b"]
    vmem = functools.partial(pl.BlockSpec, memory_space=pltpu.MemorySpace.VMEM)
    out = pl.pallas_call(
        _fused_kernel,
        out_shape=jax.ShapeDtypeStruct((B, OUT_PAD), jnp.float32),
        in_specs=[vmem() for _ in range(9)],
        out_specs=vmem(),
        compiler_params=pltpu.CompilerParams(vmem_limit_bytes=VMEM_LIMIT_BYTES),
    )(x, w[0], b[0], w[1], b[1], w[2], b[2], w[3], b[3])
    return out[:, :NUM_CLASSES]


def _forward_tiled(x, prep, tb):
    B, F = x.shape
    # Tile size: multiple of 16 (bf16 inter-stage activations) and capped so
    # the grid has >= 2 tiles -> both v7x TensorCores get work.
    TB = _round_up(min(tb, B), 16)
    TB = max(16, min(TB, _round_up(pl.cdiv(B, 2), 16)))
    n_tiles = pl.cdiv(B, TB)
    B_pad = n_tiles * TB
    need_mask = B_pad != B
    if need_mask:
        x = jnp.pad(x, ((0, B_pad - B), (0, 0)))

    cp = pltpu.CompilerParams(dimension_semantics=("parallel",),
                              vmem_limit_bytes=VMEM_LIMIT_BYTES)

    def hidden_stage(a, stats, w, b):
        d_in, d_out = w.shape
        normalize = stats is not None
        kern = functools.partial(_hidden_stage_kernel, B, TB, need_mask,
                                 normalize)
        in_specs = [pl.BlockSpec((TB, d_in), lambda i: (i, 0))]  # act tile
        args = [a]
        if normalize:
            # Packed per-tile stats of the previous layer, VMEM-resident.
            in_specs.append(pl.BlockSpec((n_tiles * 8, d_in), lambda i: (0, 0)))
            args.append(stats)
        in_specs += [pl.BlockSpec((d_in, d_out), lambda i: (0, 0)),   # W resident
                     pl.BlockSpec((1, d_out), lambda i: (0, 0))]      # b resident
        args += [w, b]
        return pl.pallas_call(
            kern,
            grid=(n_tiles,),
            in_specs=in_specs,
            out_specs=[pl.BlockSpec((TB, d_out), lambda i: (i, 0)),
                       pl.BlockSpec((8, d_out), lambda i: (i, 0))],
            out_shape=[jax.ShapeDtypeStruct((B_pad, d_out), jnp.bfloat16),
                       jax.ShapeDtypeStruct((n_tiles * 8, d_out), jnp.float32)],
            compiler_params=cp,
        )(*args)

    h, stats = hidden_stage(x, None, prep["w"][0], prep["b"][0])
    for k in (1, 2):
        h, stats = hidden_stage(h, stats, prep["w"][k], prep["b"][k])

    out = pl.pallas_call(
        functools.partial(_final_stage_kernel, B),
        grid=(n_tiles,),
        in_specs=[
            pl.BlockSpec((TB, HID_PAD), lambda i: (i, 0)),
            pl.BlockSpec((n_tiles * 8, HID_PAD), lambda i: (0, 0)),
            pl.BlockSpec((HID_PAD, OUT_PAD), lambda i: (0, 0)),
            pl.BlockSpec((1, OUT_PAD), lambda i: (0, 0)),
        ],
        out_specs=pl.BlockSpec((TB, OUT_PAD), lambda i: (i, 0)),
        out_shape=jax.ShapeDtypeStruct((B_pad, OUT_PAD), jnp.float32),
        compiler_params=cp,
    )(h, stats, prep["w"][3], prep["b"][3])

    return out[:B, :NUM_CLASSES]


def _forward_prepared(x, prep, *, tb=2048, fuse_max_batch=2048):
    x = x.astype(jnp.float32)
    if x.shape[0] <= fuse_max_batch:
        return _forward_fused(x, prep)
    return _forward_tiled(x, prep, tb)


def simple_nn_forward(x, params, *, tb=2048, fuse_max_batch=2048):
    """x: (B, 34) float32. params: dict of (in,out) weights, biases, BN affines."""
    return _forward_prepared(x, prepare_params(params), tb=tb,
                             fuse_max_batch=fuse_max_batch)


def init_params(key):
    """Shapes match SimpleNN.__init__ (weights stored (in, out)).
    Linear: U(-1/sqrt(fan_in), 1/sqrt(fan_in)) like PyTorch defaults.
    BN affine randomized (PyTorch default is gamma=1, beta=0) to exercise the
    affine->Linear fold."""
    dims = [(NUM_FEATURES, HIDDEN), (HIDDEN, HIDDEN),
            (HIDDEN, HIDDEN), (HIDDEN, NUM_CLASSES)]
    params = {}
    keys = jax.random.split(key, 2 * len(dims) + 6)
    for i, (fan_in, fan_out) in enumerate(dims):
        bound = 1.0 / (fan_in ** 0.5)
        params[f"w{i + 1}"] = jax.random.uniform(
            keys[2 * i], (fan_in, fan_out), minval=-bound, maxval=bound,
            dtype=jnp.float32)
        params[f"b{i + 1}"] = jax.random.uniform(
            keys[2 * i + 1], (1, fan_out), minval=-bound, maxval=bound,
            dtype=jnp.float32)
    for i in range(1, 4):
        params[f"g{i}"] = jax.random.uniform(
            keys[8 + 2 * (i - 1)], (1, HIDDEN), minval=0.8, maxval=1.2,
            dtype=jnp.float32)
        params[f"be{i}"] = jax.random.uniform(
            keys[9 + 2 * (i - 1)], (1, HIDDEN), minval=-0.2, maxval=0.2,
            dtype=jnp.float32)
    return params


if __name__ == "__main__":
    key = jax.random.PRNGKey(0)
    k_param, k_x = jax.random.split(key)
    params = init_params(k_param)

    B = 48   # small batch, not a tile multiple -> exercises row masking (tiled)
    x = jax.random.normal(k_x, (B, NUM_FEATURES), dtype=jnp.float32)

    # Path 1: fused single-kernel variant (default for on-chip batch sizes).
    out_fused = jax.block_until_ready(simple_nn_forward(x, params))

    # Path 2: batch-tiled pipeline forced via fuse_max_batch=0; 2 tiles of 32
    # rows -> exercises bf16 inter-stage activations, packed per-tile stats,
    # in-kernel BN reduction and last-tile row masking.
    out_tiled = jax.block_until_ready(
        simple_nn_forward(x, params, tb=32, fuse_max_batch=0))

    for out in (out_fused, out_tiled):
        assert out.shape == (B, NUM_CLASSES), out.shape
        assert out.dtype == jnp.float32

    # Reference 1: exact PyTorch training-mode semantics, all f32.
    def ref_f32(x, p):
        h = x
        for i in range(1, 4):
            y = jnp.tanh(h @ p[f"w{i}"] + p[f"b{i}"])
            m = y.mean(0, keepdims=True)
            v = ((y - m) ** 2).mean(0, keepdims=True)
            h = (y - m) / jnp.sqrt(v + BN_EPS) * p[f"g{i}"] + p[f"be{i}"]
        return h @ p["w4"] + p["b4"]

    # Reference 2: mirrors the kernel math (folded affine, bf16 dot operands,
    # optional bf16 rounding of the inter-stage activation for the tiled path).
    def ref_mirror(x, prep, h_bf16):
        h = x.astype(jnp.float32)
        for k in range(3):
            y = jnp.tanh(jnp.dot(h.astype(jnp.bfloat16), prep["w"][k],
                                 preferred_element_type=jnp.float32)
                         + prep["b"][k])
            m = y.mean(0, keepdims=True)
            v = jnp.maximum((y * y).mean(0, keepdims=True) - m * m, 0.0)
            inv = lax.rsqrt(v + BN_EPS)
            if h_bf16:
                y = y.astype(jnp.bfloat16).astype(jnp.float32)
            h = (y - m) * inv
        o = jnp.dot(h.astype(jnp.bfloat16), prep["w"][3],
                    preferred_element_type=jnp.float32) + prep["b"][3]
        return o[:, :NUM_CLASSES]

    prep = prepare_params(params)
    r_f32 = ref_f32(x, params)

    for name, out, h_bf16 in (("fused", out_fused, False),
                              ("tiled", out_tiled, True)):
        r_m = ref_mirror(x, prep, h_bf16)
        assert jnp.allclose(out, r_m, atol=2e-3, rtol=2e-3), \
            (name, float(jnp.max(jnp.abs(out - r_m))))
        assert jnp.allclose(out, r_f32, atol=5e-2, rtol=5e-2), \
            (name, float(jnp.max(jnp.abs(out - r_f32))))

    assert jnp.allclose(out_fused, out_tiled, atol=5e-2, rtol=5e-2), \
        float(jnp.max(jnp.abs(out_fused - out_tiled)))

    print("KERNEL_OK")
</pallas_src>

<mosaic_0001>
module attributes {stable_mosaic.version = 11 : i64} {
  func.func @_fused_kernel(%arg0: memref<48x34xf32, #tpu.memory_space<vmem>>, %arg1: memref<34x256xbf16, #tpu.memory_space<vmem>>, %arg2: memref<1x256xf32, #tpu.memory_space<vmem>>, %arg3: memref<256x256xbf16, #tpu.memory_space<vmem>>, %arg4: memref<1x256xf32, #tpu.memory_space<vmem>>, %arg5: memref<256x256xbf16, #tpu.memory_space<vmem>>, %arg6: memref<1x256xf32, #tpu.memory_space<vmem>>, %arg7: memref<256x128xbf16, #tpu.memory_space<vmem>>, %arg8: memref<1x128xf32, #tpu.memory_space<vmem>>, %arg9: memref<48x128xf32, #tpu.memory_space<vmem>>) attributes {dimension_semantics = [], scalar_prefetch = 0 : i64, scratch_operands = 0 : i64, tpu.core_type = #tpu.core_type<tc>} {
    %c0 = arith.constant 0 : index
    %c0_0 = arith.constant 0 : index
    %0 = vector.load %arg0[%c0, %c0_0] : memref<48x34xf32, #tpu.memory_space<vmem>>, vector<48x34xf32>
    %1 = arith.truncf %0 : vector<48x34xf32> to vector<48x34xbf16>
    %c0_1 = arith.constant 0 : index
    %c0_2 = arith.constant 0 : index
    %2 = vector.load %arg1[%c0_1, %c0_2] : memref<34x256xbf16, #tpu.memory_space<vmem>>, vector<34x256xbf16>
    %cst = arith.constant dense<0.000000e+00> : vector<48x256xf32>
    %3 = tpu.matmul %1, %2, %cst {dimension_numbers = #tpu.dot_dimension_numbers<[1], [0], [0], [1], [0, 0, 1, 1], [], []>} : vector<48x34xbf16>, vector<34x256xbf16>, vector<48x256xf32> -> vector<48x256xf32>
    %c0_3 = arith.constant 0 : index
    %c0_4 = arith.constant 0 : index
    %4 = vector.load %arg2[%c0_3, %c0_4] : memref<1x256xf32, #tpu.memory_space<vmem>>, vector<1x256xf32>
    %5 = vector.broadcast %4 : vector<1x256xf32> to vector<48x256xf32>
    %6 = arith.addf %3, %5 : vector<48x256xf32>
    %7 = math.tanh %6 : vector<48x256xf32>
    %cst_5 = arith.constant dense<0.000000e+00> : vector<256xf32>
    %8 = vector.multi_reduction <add>, %7, %cst_5 [0] : vector<48x256xf32> to vector<256xf32>
    %9 = vector.shape_cast %8 : vector<256xf32> to vector<1x256xf32>
    %cst_6 = arith.constant 4.800000e+01 : f32
    %10 = vector.broadcast %cst_6 : f32 to vector<1x256xf32>
    %11 = arith.divf %9, %10 : vector<1x256xf32>
    %12 = arith.mulf %7, %7 : vector<48x256xf32>
    %cst_7 = arith.constant dense<0.000000e+00> : vector<256xf32>
    %13 = vector.multi_reduction <add>, %12, %cst_7 [0] : vector<48x256xf32> to vector<256xf32>
    %14 = vector.shape_cast %13 : vector<256xf32> to vector<1x256xf32>
    %cst_8 = arith.constant 4.800000e+01 : f32
    %15 = vector.broadcast %cst_8 : f32 to vector<1x256xf32>
    %16 = arith.divf %14, %15 : vector<1x256xf32>
    %17 = arith.mulf %11, %11 : vector<1x256xf32>
    %18 = arith.subf %16, %17 : vector<1x256xf32>
    %cst_9 = arith.constant 0.000000e+00 : f32
    %19 = vector.broadcast %cst_9 : f32 to vector<1x256xf32>
    %20 = arith.maximumf %18, %19 : vector<1x256xf32>
    %21 = vector.broadcast %11 : vector<1x256xf32> to vector<48x256xf32>
    %22 = arith.subf %7, %21 : vector<48x256xf32>
    %cst_10 = arith.constant 9.99999974E-6 : f32
    %23 = vector.broadcast %cst_10 : f32 to vector<1x256xf32>
    %24 = arith.addf %20, %23 : vector<1x256xf32>
    %25 = math.rsqrt %24 : vector<1x256xf32>
    %26 = vector.broadcast %25 : vector<1x256xf32> to vector<48x256xf32>
    %27 = arith.mulf %22, %26 : vector<48x256xf32>
    %28 = arith.truncf %27 : vector<48x256xf32> to vector<48x256xbf16>
    %c0_11 = arith.constant 0 : index
    %c0_12 = arith.constant 0 : index
    %29 = vector.load %arg3[%c0_11, %c0_12] : memref<256x256xbf16, #tpu.memory_space<vmem>>, vector<256x256xbf16>
    %cst_13 = arith.constant dense<0.000000e+00> : vector<48x256xf32>
    %30 = tpu.matmul %28, %29, %cst_13 {dimension_numbers = #tpu.dot_dimension_numbers<[1], [0], [0], [1], [0, 0, 1, 1], [], []>} : vector<48x256xbf16>, vector<256x256xbf16>, vector<48x256xf32> -> vector<48x256xf32>
    %c0_14 = arith.constant 0 : index
    %c0_15 = arith.constant 0 : index
    %31 = vector.load %arg4[%c0_14, %c0_15] : memref<1x256xf32, #tpu.memory_space<vmem>>, vector<1x256xf32>
    %32 = vector.broadcast %31 : vector<1x256xf32> to vector<48x256xf32>
    %33 = arith.addf %30, %32 : vector<48x256xf32>
    %34 = math.tanh %33 : vector<48x256xf32>
    %cst_16 = arith.constant dense<0.000000e+00> : vector<256xf32>
    %35 = vector.multi_reduction <add>, %34, %cst_16 [0] : vector<48x256xf32> to vector<256xf32>
    %36 = vector.shape_cast %35 : vector<256xf32> to vector<1x256xf32>
    %cst_17 = arith.constant 4.800000e+01 : f32
    %37 = vector.broadcast %cst_17 : f32 to vector<1x256xf32>
    %38 = arith.divf %36, %37 : vector<1x256xf32>
    %39 = arith.mulf %34, %34 : vector<48x256xf32>
    %cst_18 = arith.constant dense<0.000000e+00> : vector<256xf32>
    %40 = vector.multi_reduction <add>, %39, %cst_18 [0] : vector<48x256xf32> to vector<256xf32>
    %41 = vector.shape_cast %40 : vector<256xf32> to vector<1x256xf32>
    %cst_19 = arith.constant 4.800000e+01 : f32
    %42 = vector.broadcast %cst_19 : f32 to vector<1x256xf32>
    %43 = arith.divf %41, %42 : vector<1x256xf32>
    %44 = arith.mulf %38, %38 : vector<1x256xf32>
    %45 = arith.subf %43, %44 : vector<1x256xf32>
    %cst_20 = arith.constant 0.000000e+00 : f32
    %46 = vector.broadcast %cst_20 : f32 to vector<1x256xf32>
    %47 = arith.maximumf %45, %46 : vector<1x256xf32>
    %48 = vector.broadcast %38 : vector<1x256xf32> to vector<48x256xf32>
    %49 = arith.subf %34, %48 : vector<48x256xf32>
    %cst_21 = arith.constant 9.99999974E-6 : f32
    %50 = vector.broadcast %cst_21 : f32 to vector<1x256xf32>
    %51 = arith.addf %47, %50 : vector<1x256xf32>
    %52 = math.rsqrt %51 : vector<1x256xf32>
    %53 = vector.broadcast %52 : vector<1x256xf32> to vector<48x256xf32>
    %54 = arith.mulf %49, %53 : vector<48x256xf32>
    %55 = arith.truncf %54 : vector<48x256xf32> to vector<48x256xbf16>
    %c0_22 = arith.constant 0 : index
    %c0_23 = arith.constant 0 : index
    %56 = vector.load %arg5[%c0_22, %c0_23] : memref<256x256xbf16, #tpu.memory_space<vmem>>, vector<256x256xbf16>
    %cst_24 = arith.constant dense<0.000000e+00> : vector<48x256xf32>
    %57 = tpu.matmul %55, %56, %cst_24 {dimension_numbers = #tpu.dot_dimension_numbers<[1], [0], [0], [1], [0, 0, 1, 1], [], []>} : vector<48x256xbf16>, vector<256x256xbf16>, vector<48x256xf32> -> vector<48x256xf32>
    %c0_25 = arith.constant 0 : index
    %c0_26 = arith.constant 0 : index
    %58 = vector.load %arg6[%c0_25, %c0_26] : memref<1x256xf32, #tpu.memory_space<vmem>>, vector<1x256xf32>
    %59 = vector.broadcast %58 : vector<1x256xf32> to vector<48x256xf32>
    %60 = arith.addf %57, %59 : vector<48x256xf32>
    %61 = math.tanh %60 : vector<48x256xf32>
    %cst_27 = arith.constant dense<0.000000e+00> : vector<256xf32>
    %62 = vector.multi_reduction <add>, %61, %cst_27 [0] : vector<48x256xf32> to vector<256xf32>
    %63 = vector.shape_cast %62 : vector<256xf32> to vector<1x256xf32>
    %cst_28 = arith.constant 4.800000e+01 : f32
    %64 = vector.broadcast %cst_28 : f32 to vector<1x256xf32>
    %65 = arith.divf %63, %64 : vector<1x256xf32>
    %66 = arith.mulf %61, %61 : vector<48x256xf32>
    %cst_29 = arith.constant dense<0.000000e+00> : vector<256xf32>
    %67 = vector.multi_reduction <add>, %66, %cst_29 [0] : vector<48x256xf32> to vector<256xf32>
    %68 = vector.shape_cast %67 : vector<256xf32> to vector<1x256xf32>
    %cst_30 = arith.constant 4.800000e+01 : f32
    %69 = vector.broadcast %cst_30 : f32 to vector<1x256xf32>
    %70 = arith.divf %68, %69 : vector<1x256xf32>
    %71 = arith.mulf %65, %65 : vector<1x256xf32>
    %72 = arith.subf %70, %71 : vector<1x256xf32>
    %cst_31 = arith.constant 0.000000e+00 : f32
    %73 = vector.broadcast %cst_31 : f32 to vector<1x256xf32>
    %74 = arith.maximumf %72, %73 : vector<1x256xf32>
    %75 = vector.broadcast %65 : vector<1x256xf32> to vector<48x256xf32>
    %76 = arith.subf %61, %75 : vector<48x256xf32>
    %cst_32 = arith.constant 9.99999974E-6 : f32
    %77 = vector.broadcast %cst_32 : f32 to vector<1x256xf32>
    %78 = arith.addf %74, %77 : vector<1x256xf32>
    %79 = math.rsqrt %78 : vector<1x256xf32>
    %80 = vector.broadcast %79 : vector<1x256xf32> to vector<48x256xf32>
    %81 = arith.mulf %76, %80 : vector<48x256xf32>
    %82 = arith.truncf %81 : vector<48x256xf32> to vector<48x256xbf16>
    %c0_33 = arith.constant 0 : index
    %c0_34 = arith.constant 0 : index
    %83 = vector.load %arg7[%c0_33, %c0_34] : memref<256x128xbf16, #tpu.memory_space<vmem>>, vector<256x128xbf16>
    %cst_35 = arith.constant dense<0.000000e+00> : vector<48x128xf32>
    %84 = tpu.matmul %82, %83, %cst_35 {dimension_numbers = #tpu.dot_dimension_numbers<[1], [0], [0], [1], [0, 0, 1, 1], [], []>} : vector<48x256xbf16>, vector<256x128xbf16>, vector<48x128xf32> -> vector<48x128xf32>
    %c0_36 = arith.constant 0 : index
    %c0_37 = arith.constant 0 : index
    %85 = vector.load %arg8[%c0_36, %c0_37] : memref<1x128xf32, #tpu.memory_space<vmem>>, vector<1x128xf32>
    %86 = vector.broadcast %85 : vector<1x128xf32> to vector<48x128xf32>
    %87 = arith.addf %84, %86 : vector<48x128xf32>
    %c0_38 = arith.constant 0 : index
    %c0_39 = arith.constant 0 : index
    %88 = vector.load %arg9[%c0_38, %c0_39] : memref<48x128xf32, #tpu.memory_space<vmem>>, vector<48x128xf32>
    tpu.vector_store %arg9[%c0_38, %c0_39], %87 {strides = array<i32>} : memref<48x128xf32, #tpu.memory_space<vmem>>, vector<48x128xf32>,
    return
  }
}

</mosaic_0001>

<llo_original>
// kernel: tpu_custom_call.1
$region0: #{tpu_custom_call.1}
  #allocation0 [shape = 'u32[]', space=smem, size = 0x4, offset = 0x4, fixed_abs, tag = 'smem constant byte address 0x4 - core index']
  #allocation1 [shape = 'u32[144,128]{1,0:T(1,128)}', space=vmem, size = 0x12000, scoped, tag = 'internal scratch']
  %s0 = inlined_call_operand.vmem [shape: f32[48,34], index: 0, kind: input, shape index: {}]
  %s1 = inlined_call_operand.vmem [shape: bf16[34,256], index: 1, kind: input, shape index: {}]
  %s2 = inlined_call_operand.vmem [shape: f32[1,256], index: 2, kind: input, shape index: {}]
  %s3 = inlined_call_operand.hbm [shape: bf16[256,256], index: 3, kind: input, shape index: {}]
  %s4 = inlined_call_operand.vmem [shape: f32[1,256], index: 4, kind: input, shape index: {}]
  %s5 = inlined_call_operand.hbm [shape: bf16[256,256], index: 5, kind: input, shape index: {}]
  %s6 = inlined_call_operand.vmem [shape: f32[1,256], index: 6, kind: input, shape index: {}]
  %s7 = inlined_call_operand.hbm [shape: bf16[256,128], index: 7, kind: input, shape index: {}]
  %s8 = inlined_call_operand.vmem [shape: f32[1,128], index: 8, kind: input, shape index: {}]
  %s9 = inlined_call_operand.hbm [shape: f32[48,128], index: 9, kind: output, shape index: {}]
  %s10 = sld [smem:[#allocation0]]
  $region58: #{tpu_custom_call.1} parent=0
    _
  %s12 = ssub.s32 1, %s10
  %s13 = scalar_select 0, %s12, %s10
  $region1: #{tpu_custom_call.1} parent=0
    #allocation2 [shape = 'u8[131072]{0}', space=vmem, size = 0x20000, scoped, tag = 'input window, operand 3, single buffered']
    #allocation3 [shape = 's32[1]{0}', space=sflag, size = 0x4, scoped, tag = 'scoped memory for tpu_custom_call.1']
    #allocation4 [shape = 's32[1]{0}', space=sflag, size = 0x4, scoped, tag = 'scoped memory for tpu_custom_call.1']
    #allocation5 [shape = 'u8[131072]{0}', space=vmem, size = 0x20000, scoped, tag = 'input window, operand 5, single buffered']
    #allocation6 [shape = 's32[1]{0}', space=sflag, size = 0x4, scoped, tag = 'scoped memory for tpu_custom_call.1']
    #allocation7 [shape = 'u8[65536]{0}', space=vmem, size = 0x10000, scoped, tag = 'input window, operand 7, single buffered']
    #allocation8 [shape = 'u8[24576]{0}', space=vmem, size = 0x6000, scoped, tag = 'output window, operand 0, single buffered']
    %14 = vsyncpa [#allocation3], 0
    %15 = vsyncpa [#allocation6], 0
    %16 = vsyncpa [#allocation4], 0
    // Predicated region
    $region2: #{tpu_custom_call.1} parent=1 // pred_check
      _
    $region3: #{tpu_custom_call.1} parent=1 // pred_check_branch
      %18 = sbr.rel (0) target = $region5
    $region4: #{tpu_custom_call.1} parent=1 // pred_region
      _
    $region5: #{tpu_custom_call.1} parent=1 // pred_fallthru
      _
    // Predicated region
    $region6: #{tpu_custom_call.1} parent=1 // pred_check
      _
    $region7: #{tpu_custom_call.1} parent=1 // pred_check_branch
      %20 = sbr.rel (0) target = $region9
    $region8: #{tpu_custom_call.1} parent=1 // pred_region
      _
    $region9: #{tpu_custom_call.1} parent=1 // pred_fallthru
      _
    // Predicated region
    $region10: #{tpu_custom_call.1} parent=1 // pred_check
      _
    $region11: #{tpu_custom_call.1} parent=1 // pred_check_branch
      %22 = sbr.rel (0) target = $region13
    $region12: #{tpu_custom_call.1} parent=1 // pred_region
      _
    $region13: #{tpu_custom_call.1} parent=1 // pred_fallthru
      _
    // Predicated region
    $region14: #{tpu_custom_call.1} parent=1 // pred_check
      _
    $region15: #{tpu_custom_call.1} parent=1 // pred_check_branch
      %24 = sbr.rel (0) target = $region17
    $region16: #{tpu_custom_call.1} parent=1 // pred_region
      %s26 = ssub.s32 4096, 4096
      %27 = vsyncadd [#allocation3], %s26
      %s28 = sshll.u32 [#allocation2], 4
      %s29 = int_to_ptr.vmem [resolvable:$true] %s28
      %34 = dma.hbm_to_vmem [thread:$0]  %s3, 4096, %s29, [#allocation3], 128, 128, 8
    $region17: #{tpu_custom_call.1} parent=1 // pred_fallthru
      _
    // Predicated region
    $region18: #{tpu_custom_call.1} parent=1 // pred_check
      _
    $region19: #{tpu_custom_call.1} parent=1 // pred_check_branch
      %36 = sbr.rel (0) target = $region21
    $region20: #{tpu_custom_call.1} parent=1 // pred_region
      _
    $region21: #{tpu_custom_call.1} parent=1 // pred_fallthru
      _
    // Predicated region
    $region22: #{tpu_custom_call.1} parent=1 // pred_check
      _
    $region23: #{tpu_custom_call.1} parent=1 // pred_check_branch
      %38 = sbr.rel (0) target = $region25
    $region24: #{tpu_custom_call.1} parent=1 // pred_region
      %s40 = ssub.s32 4096, 4096
      %41 = vsyncadd [#allocation6], %s40
      %s42 = sshll.u32 [#allocation5], 4
      %s43 = int_to_ptr.vmem [resolvable:$true] %s42
      %48 = dma.hbm_to_vmem [thread:$0]  %s5, 4096, %s43, [#allocation6], 128, 128, 8
    $region25: #{tpu_custom_call.1} parent=1 // pred_fallthru
      _
    // Predicated region
    $region26: #{tpu_custom_call.1} parent=1 // pred_check
      _
    $region27: #{tpu_custom_call.1} parent=1 // pred_check_branch
      %50 = sbr.rel (0) target = $region29
    $region28: #{tpu_custom_call.1} parent=1 // pred_region
      _
    $region29: #{tpu_custom_call.1} parent=1 // pred_fallthru
      _
    // Predicated region
    $region30: #{tpu_custom_call.1} parent=1 // pred_check
      _
    $region31: #{tpu_custom_call.1} parent=1 // pred_check_branch
      %52 = sbr.rel (0) target = $region33
    $region32: #{tpu_custom_call.1} parent=1 // pred_region
      %s54 = ssub.s32 2048, 2048
      %55 = vsyncadd [#allocation6], %s54
      %s56 = sshll.u32 [#allocation7], 4
      %s57 = int_to_ptr.vmem [resolvable:$true] %s56
      %62 = dma.hbm_to_vmem [thread:$0]  %s7, 2048, %s57, [#allocation6], 64, 64, 4
    $region33: #{tpu_custom_call.1} parent=1 // pred_fallthru
      _
    // Predicated region
    $region34: #{tpu_custom_call.1} parent=1 // pred_check
      _
    $region35: #{tpu_custom_call.1} parent=1 // pred_check_branch
      %64 = sbr.rel (0) target = $region37
    $region36: #{tpu_custom_call.1} parent=1 // pred_region
      _
    $region37: #{tpu_custom_call.1} parent=1 // pred_fallthru
      _
    // Predicated region
    $region38: #{tpu_custom_call.1} parent=1 // pred_check
      _
    $region39: #{tpu_custom_call.1} parent=1 // pred_check_branch
      %66 = sbr.rel (0) target = $region41
    $region40: #{tpu_custom_call.1} parent=1 // pred_region
      %67 = dma.done [#allocation3], 4096
    $region41: #{tpu_custom_call.1} parent=1 // pred_fallthru
      _
    // Predicated region
    $region42: #{tpu_custom_call.1} parent=1 // pred_check
      _
    $region43: #{tpu_custom_call.1} parent=1 // pred_check_branch
      %69 = sbr.rel (0) target = $region45
    $region44: #{tpu_custom_call.1} parent=1 // pred_region
      %70 = dma.done [#allocation6], 4096
    $region45: #{tpu_custom_call.1} parent=1 // pred_fallthru
      _
    // Predicated region
    $region46: #{tpu_custom_call.1} parent=1 // pred_check
      _
    $region47: #{tpu_custom_call.1} parent=1 // pred_check_branch
      %72 = sbr.rel (0) target = $region49
    $region48: #{tpu_custom_call.1} parent=1 // pred_region
      %73 = dma.done [#allocation6], 2048
    $region49: #{tpu_custom_call.1} parent=1 // pred_fallthru
      _
    %v75 = vld [vmem:[%s0] sm:$0xff]
    %v76 = vld [vmem:[%s0 + $0x8] sm:$0xff]
    %v77 = vld [vmem:[%s0 + $0x10] sm:$0xff]
    %v78 = vld [vmem:[%s0 + $0x18] sm:$0xff]
    %v79 = vld [vmem:[%s0 + $0x20] sm:$0xff]
    %v80 = vld [vmem:[%s0 + $0x28] sm:$0xff]
    %v81 = vpack.c.bf16 %v76, %v75
    %v82 = vpack.c.bf16 %v78, %v77
    %v83 = vpack.c.bf16 %v80, %v79
    %v84 = vld [vmem:[%s1] sm:$0xff]
    %v85 = vld [vmem:[%s1 + $0x8] sm:$0xff]
    %v86 = vld [vmem:[%s1 + $0x10] sm:$0xff]
    %v87 = vld [vmem:[%s1 + $0x18] sm:$0xff]
    %v88 = vld [vmem:[%s1 + $0x20] sm:$0x11]
    %v89 = vld [vmem:[%s2] sm:$0x3]
    %v91 = vlaneseq
    %v92 = vshrl.u32 %v91, 7
    %v93 = vsub.s32 0, %v92
    %v94 = vrot.slane %v89, %v93
    %v95 = vlaneseq
    %v96 = vshrl.u32 %v95, 7
    %v97 = vsub.s32 1, %v96
    %v98 = vrot.slane %v89, %v97
    %v106 = vunpack.c.l.b16 %v84
    %v107 = vunpack.c.h.b16 %v84
    %v108 = vunpack.c.l.b16 %v85
    %v109 = vunpack.c.h.b16 %v85
    %v110 = vunpack.c.l.b16 %v86
    %v111 = vunpack.c.h.b16 %v86
    %v112 = vunpack.c.l.b16 %v87
    %v113 = vunpack.c.h.b16 %v87
    %v114 = vunpack.c.l.b16 %v88
    %v115 = vunpack.c.h.b16 %v88
    %v116 = vpack.c.b16 %v108, %v106
    %v117 = vpack.c.b16 %v109, %v107
    %v118 = vpack.c.b16 %v112, %v110
    %v119 = vpack.c.b16 %v113, %v111
    %v120 = vpack.c.b16 %v114, %v114
    %v121 = vpack.c.b16 %v115, %v115
    %vm126 = vcmask 277504
    %v128 = vsel %vm126, %v81, 0
    %v131 = vsel %vm126, %v82, 0
    %v134 = vsel %vm126, %v83, 0
    %vm136 = vcmask 1040384
    %v138 = vsel %vm136, %v120, 0
    %v141 = vsel %vm136, %v121, 0
    %143 = vmatprep.subr.bf16.mxu0 0
    %144 = vmatpush1.bf16.msra.mxu0 0
    %145 = vmatprep.subr.bf16.mxu0 0
    %146 = vmatpush1.bf16.msra.mxu0 0
    %147 = vmatprep.subr.bf16.mxu0 0
    %148 = vmatpush1.bf16.msra.mxu0 0
    %149 = vmatprep.subr.bf16.mxu0 0
    %150 = vmatpush1.bf16.msra.mxu0 0
    %151 = vmatprep.subr.bf16.mxu0 0
    %152 = vmatpush1.bf16.msra.mxu0 0
    %153 = vmatprep.subr.bf16.mxu0 %v141
    %154 = vmatpush1.bf16.msra.mxu0 %v138
    %155 = vmatprep.subr.bf16.mxu0 %v119
    %156 = vmatpush1.bf16.msra.mxu0 %v118
    %157 = vmatprep.subr.bf16.mxu0 %v117
    %158 = vmatpush1.bf16.msra.mxu0 %v116
    %159 = vmatprep.subr.bf16.mxu0 0
    %160 = vmatpush2.bf16.msra.mxu0 0
    %161 = vmatprep.subr.bf16.mxu0 0
    %162 = vmatpush2.bf16.msra.mxu0 0
    %163 = vmatprep.subr.bf16.mxu0 0
    %164 = vmatpush2.bf16.msra.mxu0 0
    %165 = vmatprep.subr.bf16.mxu0 0
    %166 = vmatpush2.bf16.msra.mxu0 0
    %167 = vmatprep.subr.bf16.mxu0 0
    %168 = vmatpush2.bf16.msra.mxu0 0
    %169 = vmatprep.subr.bf16.mxu0 0
    %170 = vmatpush2.bf16.msra.mxu0 0
    %171 = vmatprep.subr.bf16.mxu0 0
    %172 = vmatpush2.bf16.msra.mxu0 0
    %173 = vmatprep.subr.bf16.mxu0 0
    %174 = vmatpush2.bf16.msra.mxu0 0
    %175 = vmatprep.mubr.bf16.mxu0 0
    %176 = vmatmul.mubr.bf16.gmra.mxu0 %v128
    %v177 = vpop.f32.mrf.mxu0
    %v178 = vadd.f32 %v94, %v177
    %v179 = vpop.f32.mrf.mxu0
    %v180 = vadd.f32 %v98, %v179
    %v181 = vpop.f32.mrf.mxu0
    %v182 = vadd.f32 %v94, %v181
    %v183 = vpop.f32.mrf.mxu0
    %v184 = vadd.f32 %v98, %v183
    %185 = vmatprep.mubr.bf16.mxu0 0
    %186 = vmatmul.mubr.bf16.gmra.mxu0 %v131
    %v187 = vpop.f32.mrf.mxu0
    %v188 = vadd.f32 %v94, %v187
    %v189 = vpop.f32.mrf.mxu0
    %v190 = vadd.f32 %v98, %v189
    %v191 = vpop.f32.mrf.mxu0
    %v192 = vadd.f32 %v94, %v191
    %v193 = vpop.f32.mrf.mxu0
    %v194 = vadd.f32 %v98, %v193
    %195 = vmatprep.mubr.bf16.mxu0 0
    %196 = vmatmul.mubr.bf16.gmra.mxu0 %v134
    %v197 = vpop.f32.mrf.mxu0
    %v198 = vadd.f32 %v94, %v197
    %v199 = vpop.f32.mrf.mxu0
    %v200 = vadd.f32 %v98, %v199
    %v201 = vpop.f32.mrf.mxu0
    %v202 = vadd.f32 %v94, %v201
    %v203 = vpop.f32.mrf.mxu0
    %v204 = vadd.f32 %v98, %v203
    %205 = vdwg.mxu0
    %v206 = vtanh.pop %v178
    %v207 = vtanh.pop %v180
    %v208 = vtanh.pop %v182
    %v209 = vtanh.pop %v184
    %v210 = vtanh.pop %v188
    %v211 = vtanh.pop %v190
    %v212 = vtanh.pop %v192
    %v213 = vtanh.pop %v194
    %v214 = vtanh.pop %v198
    %v215 = vtanh.pop %v200
    %v216 = vtanh.pop %v202
    %v217 = vtanh.pop %v204
    %v218 = vadd.f32 %v206, %v208
    %v219 = vadd.f32 %v218, %v210
    %v220 = vadd.f32 %v219, %v212
    %v221 = vadd.f32 %v220, %v214
    %v222 = vadd.f32 %v221, %v216
    %v223 = vrot.slane %v222, 4
    %v224 = vadd.f32 %v222, %v223
    %v225 = vrot.slane %v224, 2
    %v226 = vadd.f32 %v224, %v225
    %v227 = vrot.slane %v226, 1
    %v228 = vadd.f32 %v226, %v227
    %v229 = vadd.f32 %v207, %v209
    %v230 = vadd.f32 %v229, %v211
    %v231 = vadd.f32 %v230, %v213
    %v232 = vadd.f32 %v231, %v215
    %v233 = vadd.f32 %v232, %v217
    %v234 = vrot.slane %v233, 4
    %v235 = vadd.f32 %v233, %v234
    %v236 = vrot.slane %v235, 2
    %v237 = vadd.f32 %v235, %v236
    %v238 = vrot.slane %v237, 1
    %v239 = vadd.f32 %v237, %v238
    %v240 = vrcp.pop 48.0
    %v241 = vmul.f32 %v228, %v240
    %v242 = vmul.f32 %v239, %v240
    %v243 = vmul.f32 %v206, %v206
    %v244 = vmul.f32 %v207, %v207
    %v245 = vmul.f32 %v208, %v208
    %v246 = vmul.f32 %v209, %v209
    %v247 = vmul.f32 %v210, %v210
    %v248 = vmul.f32 %v211, %v211
    %v249 = vmul.f32 %v212, %v212
    %v250 = vmul.f32 %v213, %v213
    %v251 = vmul.f32 %v214, %v214
    %v252 = vmul.f32 %v215, %v215
    %v253 = vmul.f32 %v216, %v216
    %v254 = vmul.f32 %v217, %v217
    %v255 = vadd.f32 %v243, %v245
    %v256 = vadd.f32 %v255, %v247
    %v257 = vadd.f32 %v256, %v249
    %v258 = vadd.f32 %v257, %v251
    %v259 = vadd.f32 %v258, %v253
    %v260 = vrot.slane %v259, 4
    %v261 = vadd.f32 %v259, %v260
    %v262 = vrot.slane %v261, 2
    %v263 = vadd.f32 %v261, %v262
    %v264 = vrot.slane %v263, 1
    %v265 = vadd.f32 %v263, %v264
    %v266 = vadd.f32 %v244, %v246
    %v267 = vadd.f32 %v266, %v248
    %v268 = vadd.f32 %v267, %v250
    %v269 = vadd.f32 %v268, %v252
    %v270 = vadd.f32 %v269, %v254
    %v271 = vrot.slane %v270, 4
    %v272 = vadd.f32 %v270, %v271
    %v273 = vrot.slane %v272, 2
    %v274 = vadd.f32 %v272, %v273
    %v275 = vrot.slane %v274, 1
    %v276 = vadd.f32 %v274, %v275
    %v277 = vmul.f32 %v265, %v240
    %v278 = vmul.f32 %v276, %v240
    %v279 = vmul.f32 %v241, %v241
    %v280 = vmul.f32 %v242, %v242
    %v281 = vsub.f32 %v277, %v279
    %v282 = vsub.f32 %v278, %v280
    %v283 = vmax.f32 %v281, 0.0
    %v284 = vmax.f32 %v282, 0.0
    %v285 = vsub.f32 %v206, %v241
    %v286 = vsub.f32 %v207, %v242
    %v287 = vsub.f32 %v208, %v241
    %v288 = vsub.f32 %v209, %v242
    %v289 = vsub.f32 %v210, %v241
    %v290 = vsub.f32 %v211, %v242
    %v291 = vsub.f32 %v212, %v241
    %v292 = vsub.f32 %v213, %v242
    %v293 = vsub.f32 %v214, %v241
    %v294 = vsub.f32 %v215, %v242
    %v295 = vsub.f32 %v216, %v241
    %v296 = vsub.f32 %v217, %v242
    %v297 = vadd.f32 %v283, 1e-05
    %v298 = vadd.f32 %v284, 1e-05
    %v299 = vrsqrt.pop %v297
    %v300 = vrsqrt.pop %v298
    %v301 = vmul.f32 %v285, %v299
    %v302 = vmul.f32 %v286, %v300
    %v303 = vmul.f32 %v287, %v299
    %v304 = vmul.f32 %v288, %v300
    %v305 = vmul.f32 %v289, %v299
    %v306 = vmul.f32 %v290, %v300
    %v307 = vmul.f32 %v291, %v299
    %v308 = vmul.f32 %v292, %v300
    %v309 = vmul.f32 %v293, %v299
    %v310 = vmul.f32 %v294, %v300
    %v311 = vmul.f32 %v295, %v299
    %v312 = vmul.f32 %v296, %v300
    %v313 = vpack.c.bf16 %v303, %v301
    %v314 = vpack.c.bf16 %v304, %v302
    %v315 = vpack.c.bf16 %v307, %v305
    %v316 = vpack.c.bf16 %v308, %v306
    %v317 = vpack.c.bf16 %v311, %v309
    %v318 = vpack.c.bf16 %v312, %v310
    %v319 = vld [vmem:[#allocation2] sm:$0xff]
    %v320 = vld [vmem:[#allocation2 + $0x8] sm:$0xff]
    %v321 = vld [vmem:[#allocation2 + $0x10] sm:$0xff]
    %v322 = vld [vmem:[#allocation2 + $0x18] sm:$0xff]
    %v323 = vld [vmem:[#allocation2 + $0x20] sm:$0xff]
    %v324 = vld [vmem:[#allocation2 + $0x28] sm:$0xff]
    %v325 = vld [vmem:[#allocation2 + $0x30] sm:$0xff]
    %v326 = vld [vmem:[#allocation2 + $0x38] sm:$0xff]
    %v327 = vld [vmem:[#allocation2 + $0x40] sm:$0xff]
    %v328 = vld [vmem:[#allocation2 + $0x48] sm:$0xff]
    %v329 = vld [vmem:[#allocation2 + $0x50] sm:$0xff]
    %v330 = vld [vmem:[#allocation2 + $0x58] sm:$0xff]
    %v331 = vld [vmem:[#allocation2 + $0x60] sm:$0xff]
    %v332 = vld [vmem:[#allocation2 + $0x68] sm:$0xff]
    %v333 = vld [vmem:[#allocation2 + $0x70] sm:$0xff]
    %v334 = vld [vmem:[#allocation2 + $0x78] sm:$0xff]
    %v335 = vld [vmem:[#allocation2 + $0x80] sm:$0xff]
    %v336 = vld [vmem:[#allocation2 + $0x88] sm:$0xff]
    %v337 = vld [vmem:[#allocation2 + $0x90] sm:$0xff]
    %v338 = vld [vmem:[#allocation2 + $0x98] sm:$0xff]
    %v339 = vld [vmem:[#allocation2 + $0xa0] sm:$0xff]
    %v340 = vld [vmem:[#allocation2 + $0xa8] sm:$0xff]
    %v341 = vld [vmem:[#allocation2 + $0xb0] sm:$0xff]
    %v342 = vld [vmem:[#allocation2 + $0xb8] sm:$0xff]
    %v343 = vld [vmem:[#allocation2 + $0xc0] sm:$0xff]
    %v344 = vld [vmem:[#allocation2 + $0xc8] sm:$0xff]
    %v345 = vld [vmem:[#allocation2 + $0xd0] sm:$0xff]
    %v346 = vld [vmem:[#allocation2 + $0xd8] sm:$0xff]
    %v347 = vld [vmem:[#allocation2 + $0xe0] sm:$0xff]
    %v348 = vld [vmem:[#allocation2 + $0xe8] sm:$0xff]
    %v349 = vld [vmem:[#allocation2 + $0xf0] sm:$0xff]
    %v350 = vld [vmem:[#allocation2 + $0xf8] sm:$0xff]
    %v351 = vld [vmem:[%s4] sm:$0x3]
    %v353 = vlaneseq
    %v354 = vshrl.u32 %v353, 7
    %v355 = vsub.s32 0, %v354
    %v356 = vrot.slane %v351, %v355
    %v357 = vlaneseq
    %v358 = vshrl.u32 %v357, 7
    %v359 = vsub.s32 1, %v358
    %v360 = vrot.slane %v351, %v359
    %v395 = vunpack.c.l.b16 %v319
    %v396 = vunpack.c.h.b16 %v319
    %v397 = vunpack.c.l.b16 %v320
    %v398 = vunpack.c.h.b16 %v320
    %v399 = vunpack.c.l.b16 %v321
    %v400 = vunpack.c.h.b16 %v321
    %v401 = vunpack.c.l.b16 %v322
    %v402 = vunpack.c.h.b16 %v322
    %v403 = vunpack.c.l.b16 %v323
    %v404 = vunpack.c.h.b16 %v323
    %v405 = vunpack.c.l.b16 %v324
    %v406 = vunpack.c.h.b16 %v324
    %v407 = vunpack.c.l.b16 %v325
    %v408 = vunpack.c.h.b16 %v325
    %v409 = vunpack.c.l.b16 %v326
    %v410 = vunpack.c.h.b16 %v326
    %v411 = vunpack.c.l.b16 %v327
    %v412 = vunpack.c.h.b16 %v327
    %v413 = vunpack.c.l.b16 %v328
    %v414 = vunpack.c.h.b16 %v328
    %v415 = vunpack.c.l.b16 %v329
    %v416 = vunpack.c.h.b16 %v329
    %v417 = vunpack.c.l.b16 %v330
    %v418 = vunpack.c.h.b16 %v330
    %v419 = vunpack.c.l.b16 %v331
    %v420 = vunpack.c.h.b16 %v331
    %v421 = vunpack.c.l.b16 %v332
    %v422 = vunpack.c.h.b16 %v332
    %v423 = vunpack.c.l.b16 %v333
    %v424 = vunpack.c.h.b16 %v333
    %v425 = vunpack.c.l.b16 %v334
    %v426 = vunpack.c.h.b16 %v334
    %v427 = vunpack.c.l.b16 %v335
    %v428 = vunpack.c.h.b16 %v335
    %v429 = vunpack.c.l.b16 %v336
    %v430 = vunpack.c.h.b16 %v336
    %v431 = vunpack.c.l.b16 %v337
    %v432 = vunpack.c.h.b16 %v337
    %v433 = vunpack.c.l.b16 %v338
    %v434 = vunpack.c.h.b16 %v338
    %v435 = vunpack.c.l.b16 %v339
    %v436 = vunpack.c.h.b16 %v339
    %v437 = vunpack.c.l.b16 %v340
    %v438 = vunpack.c.h.b16 %v340
    %v439 = vunpack.c.l.b16 %v341
    %v440 = vunpack.c.h.b16 %v341
    %v441 = vunpack.c.l.b16 %v342
    %v442 = vunpack.c.h.b16 %v342
    %v443 = vunpack.c.l.b16 %v343
    %v444 = vunpack.c.h.b16 %v343
    %v445 = vunpack.c.l.b16 %v344
    %v446 = vunpack.c.h.b16 %v344
    %v447 = vunpack.c.l.b16 %v345
    %v448 = vunpack.c.h.b16 %v345
    %v449 = vunpack.c.l.b16 %v346
    %v450 = vunpack.c.h.b16 %v346
    %v451 = vunpack.c.l.b16 %v347
    %v452 = vunpack.c.h.b16 %v347
    %v453 = vunpack.c.l.b16 %v348
    %v454 = vunpack.c.h.b16 %v348
    %v455 = vunpack.c.l.b16 %v349
    %v456 = vunpack.c.h.b16 %v349
    %v457 = vunpack.c.l.b16 %v350
    %v458 = vunpack.c.h.b16 %v350
    %v459 = vpack.c.b16 %v397, %v395
    %v460 = vpack.c.b16 %v398, %v396
    %v461 = vpack.c.b16 %v401, %v399
    %v462 = vpack.c.b16 %v402, %v400
    %v463 = vpack.c.b16 %v405, %v403
    %v464 = vpack.c.b16 %v406, %v404
    %v465 = vpack.c.b16 %v409, %v407
    %v466 = vpack.c.b16 %v410, %v408
    %v467 = vpack.c.b16 %v413, %v411
    %v468 = vpack.c.b16 %v414, %v412
    %v469 = vpack.c.b16 %v417, %v415
    %v470 = vpack.c.b16 %v418, %v416
    %v471 = vpack.c.b16 %v421, %v419
    %v472 = vpack.c.b16 %v422, %v420
    %v473 = vpack.c.b16 %v425, %v423
    %v474 = vpack.c.b16 %v426, %v424
    %v475 = vpack.c.b16 %v429, %v427
    %v476 = vpack.c.b16 %v430, %v428
    %v477 = vpack.c.b16 %v433, %v431
    %v478 = vpack.c.b16 %v434, %v432
    %v479 = vpack.c.b16 %v437, %v435
    %v480 = vpack.c.b16 %v438, %v436
    %v481 = vpack.c.b16 %v441, %v439
    %v482 = vpack.c.b16 %v442, %v440
    %v483 = vpack.c.b16 %v445, %v443
    %v484 = vpack.c.b16 %v446, %v444
    %v485 = vpack.c.b16 %v449, %v447
    %v486 = vpack.c.b16 %v450, %v448
    %v487 = vpack.c.b16 %v453, %v451
    %v488 = vpack.c.b16 %v454, %v452
    %v489 = vpack.c.b16 %v457, %v455
    %v490 = vpack.c.b16 %v458, %v456
    %523 = vmatprep.subr.bf16.mxu0 %v474
    %524 = vmatpush1.bf16.msra.mxu0 %v473
    %525 = vmatprep.subr.bf16.mxu0 %v472
    %526 = vmatpush1.bf16.msra.mxu0 %v471
    %527 = vmatprep.subr.bf16.mxu0 %v470
    %528 = vmatpush1.bf16.msra.mxu0 %v469
    %529 = vmatprep.subr.bf16.mxu0 %v468
    %530 = vmatpush1.bf16.msra.mxu0 %v467
    %531 = vmatprep.subr.bf16.mxu0 %v466
    %532 = vmatpush1.bf16.msra.mxu0 %v465
    %533 = vmatprep.subr.bf16.mxu0 %v464
    %534 = vmatpush1.bf16.msra.mxu0 %v463
    %535 = vmatprep.subr.bf16.mxu0 %v462
    %536 = vmatpush1.bf16.msra.mxu0 %v461
    %537 = vmatprep.subr.bf16.mxu0 %v460
    %538 = vmatpush1.bf16.msra.mxu0 %v459
    %539 = vmatprep.subr.bf16.mxu0 %v490
    %540 = vmatpush2.bf16.msra.mxu0 %v489
    %541 = vmatprep.subr.bf16.mxu0 %v488
    %542 = vmatpush2.bf16.msra.mxu0 %v487
    %543 = vmatprep.subr.bf16.mxu0 %v486
    %544 = vmatpush2.bf16.msra.mxu0 %v485
    %545 = vmatprep.subr.bf16.mxu0 %v484
    %546 = vmatpush2.bf16.msra.mxu0 %v483
    %547 = vmatprep.subr.bf16.mxu0 %v482
    %548 = vmatpush2.bf16.msra.mxu0 %v481
    %549 = vmatprep.subr.bf16.mxu0 %v480
    %550 = vmatpush2.bf16.msra.mxu0 %v479
    %551 = vmatprep.subr.bf16.mxu0 %v478
    %552 = vmatpush2.bf16.msra.mxu0 %v477
    %553 = vmatprep.subr.bf16.mxu0 %v476
    %554 = vmatpush2.bf16.msra.mxu0 %v475
    %555 = vmatprep.mubr.bf16.mxu0 %v314
    %556 = vmatmul.mubr.bf16.gmra.mxu0 %v313
    %v557 = vpop.f32.mrf.mxu0
    %v558 = vadd.f32 %v356, %v557
    %v559 = vpop.f32.mrf.mxu0
    %v560 = vadd.f32 %v360, %v559
    %v561 = vpop.f32.mrf.mxu0
    %v562 = vadd.f32 %v356, %v561
    %v563 = vpop.f32.mrf.mxu0
    %v564 = vadd.f32 %v360, %v563
    %565 = vmatprep.mubr.bf16.mxu0 %v316
    %566 = vmatmul.mubr.bf16.gmra.mxu0 %v315
    %v567 = vpop.f32.mrf.mxu0
    %v568 = vadd.f32 %v356, %v567
    %v569 = vpop.f32.mrf.mxu0
    %v570 = vadd.f32 %v360, %v569
    %v571 = vpop.f32.mrf.mxu0
    %v572 = vadd.f32 %v356, %v571
    %v573 = vpop.f32.mrf.mxu0
    %v574 = vadd.f32 %v360, %v573
    %575 = vmatprep.mubr.bf16.mxu0 %v318
    %576 = vmatmul.mubr.bf16.gmra.mxu0 %v317
    %v577 = vpop.f32.mrf.mxu0
    %v578 = vadd.f32 %v356, %v577
    %v579 = vpop.f32.mrf.mxu0
    %v580 = vadd.f32 %v360, %v579
    %v581 = vpop.f32.mrf.mxu0
    %v582 = vadd.f32 %v356, %v581
    %v583 = vpop.f32.mrf.mxu0
    %v584 = vadd.f32 %v360, %v583
    %585 = vdwg.mxu0
    %v586 = vtanh.pop %v558
    %v587 = vtanh.pop %v560
    %v588 = vtanh.pop %v562
    %v589 = vtanh.pop %v564
    %v590 = vtanh.pop %v568
    %v591 = vtanh.pop %v570
    %v592 = vtanh.pop %v572
    %v593 = vtanh.pop %v574
    %v594 = vtanh.pop %v578
    %v595 = vtanh.pop %v580
    %v596 = vtanh.pop %v582
    %v597 = vtanh.pop %v584
    %v598 = vadd.f32 %v586, %v588
    %v599 = vadd.f32 %v598, %v590
    %v600 = vadd.f32 %v599, %v592
    %v601 = vadd.f32 %v600, %v594
    %v602 = vadd.f32 %v601, %v596
    %v603 = vrot.slane %v602, 4
    %v604 = vadd.f32 %v602, %v603
    %v605 = vrot.slane %v604, 2
    %v606 = vadd.f32 %v604, %v605
    %v607 = vrot.slane %v606, 1
    %v608 = vadd.f32 %v606, %v607
    %v609 = vadd.f32 %v587, %v589
    %v610 = vadd.f32 %v609, %v591
    %v611 = vadd.f32 %v610, %v593
    %v612 = vadd.f32 %v611, %v595
    %v613 = vadd.f32 %v612, %v597
    %v614 = vrot.slane %v613, 4
    %v615 = vadd.f32 %v613, %v614
    %v616 = vrot.slane %v615, 2
    %v617 = vadd.f32 %v615, %v616
    %v618 = vrot.slane %v617, 1
    %v619 = vadd.f32 %v617, %v618
    %v620 = vmul.f32 %v608, %v240
    %v621 = vmul.f32 %v619, %v240
    %v622 = vmul.f32 %v586, %v586
    %v623 = vmul.f32 %v587, %v587
    %v624 = vmul.f32 %v588, %v588
    %v625 = vmul.f32 %v589, %v589
    %v626 = vmul.f32 %v590, %v590
    %v627 = vmul.f32 %v591, %v591
    %v628 = vmul.f32 %v592, %v592
    %v629 = vmul.f32 %v593, %v593
    %v630 = vmul.f32 %v594, %v594
    %v631 = vmul.f32 %v595, %v595
    %v632 = vmul.f32 %v596, %v596
    %v633 = vmul.f32 %v597, %v597
    %v634 = vadd.f32 %v622, %v624
    %v635 = vadd.f32 %v634, %v626
    %v636 = vadd.f32 %v635, %v628
    %v637 = vadd.f32 %v636, %v630
    %v638 = vadd.f32 %v637, %v632
    %v639 = vrot.slane %v638, 4
    %v640 = vadd.f32 %v638, %v639
    %v641 = vrot.slane %v640, 2
    %v642 = vadd.f32 %v640, %v641
    %v643 = vrot.slane %v642, 1
    %v644 = vadd.f32 %v642, %v643
    %v645 = vadd.f32 %v623, %v625
    %v646 = vadd.f32 %v645, %v627
    %v647 = vadd.f32 %v646, %v629
    %v648 = vadd.f32 %v647, %v631
    %v649 = vadd.f32 %v648, %v633
    %v650 = vrot.slane %v649, 4
    %v651 = vadd.f32 %v649, %v650
    %v652 = vrot.slane %v651, 2
    %v653 = vadd.f32 %v651, %v652
    %v654 = vrot.slane %v653, 1
    %v655 = vadd.f32 %v653, %v654
    %v656 = vmul.f32 %v644, %v240
    %v657 = vmul.f32 %v655, %v240
    %v658 = vmul.f32 %v620, %v620
    %v659 = vmul.f32 %v621, %v621
    %v660 = vsub.f32 %v656, %v658
    %v661 = vsub.f32 %v657, %v659
    %v662 = vmax.f32 %v660, 0.0
    %v663 = vmax.f32 %v661, 0.0
    %v664 = vsub.f32 %v586, %v620
    %v665 = vsub.f32 %v587, %v621
    %v666 = vsub.f32 %v588, %v620
    %v667 = vsub.f32 %v589, %v621
    %v668 = vsub.f32 %v590, %v620
    %v669 = vsub.f32 %v591, %v621
    %v670 = vsub.f32 %v592, %v620
    %v671 = vsub.f32 %v593, %v621
    %v672 = vsub.f32 %v594, %v620
    %v673 = vsub.f32 %v595, %v621
    %v674 = vsub.f32 %v596, %v620
    %v675 = vsub.f32 %v597, %v621
    %v676 = vadd.f32 %v662, 1e-05
    %v677 = vadd.f32 %v663, 1e-05
    %v678 = vrsqrt.pop %v676
    %v679 = vrsqrt.pop %v677
    %v680 = vmul.f32 %v664, %v678
    %v681 = vmul.f32 %v665, %v679
    %v682 = vmul.f32 %v666, %v678
    %v683 = vmul.f32 %v667, %v679
    %v684 = vmul.f32 %v668, %v678
    %v685 = vmul.f32 %v669, %v679
    %v686 = vmul.f32 %v670, %v678
    %v687 = vmul.f32 %v671, %v679
    %v688 = vmul.f32 %v672, %v678
    %v689 = vmul.f32 %v673, %v679
    %v690 = vmul.f32 %v674, %v678
    %v691 = vmul.f32 %v675, %v679
    %v692 = vpack.c.bf16 %v682, %v680
    %v693 = vpack.c.bf16 %v683, %v681
    %v694 = vpack.c.bf16 %v686, %v684
    %v695 = vpack.c.bf16 %v687, %v685
    %v696 = vpack.c.bf16 %v690, %v688
    %v697 = vpack.c.bf16 %v691, %v689
    %v698 = vld [vmem:[#allocation5] sm:$0xff]
    %v699 = vld [vmem:[#allocation5 + $0x8] sm:$0xff]
    %v700 = vld [vmem:[#allocation5 + $0x10] sm:$0xff]
    %v701 = vld [vmem:[#allocation5 + $0x18] sm:$0xff]
    %v702 = vld [vmem:[#allocation5 + $0x20] sm:$0xff]
    %v703 = vld [vmem:[#allocation5 + $0x28] sm:$0xff]
    %v704 = vld [vmem:[#allocation5 + $0x30] sm:$0xff]
    %v705 = vld [vmem:[#allocation5 + $0x38] sm:$0xff]
    %v706 = vld [vmem:[#allocation5 + $0x40] sm:$0xff]
    %v707 = vld [vmem:[#allocation5 + $0x48] sm:$0xff]
    %v708 = vld [vmem:[#allocation5 + $0x50] sm:$0xff]
    %v709 = vld [vmem:[#allocation5 + $0x58] sm:$0xff]
    %v710 = vld [vmem:[#allocation5 + $0x60] sm:$0xff]
    %v711 = vld [vmem:[#allocation5 + $0x68] sm:$0xff]
    %v712 = vld [vmem:[#allocation5 + $0x70] sm:$0xff]
    %v713 = vld [vmem:[#allocation5 + $0x78] sm:$0xff]
    %v714 = vld [vmem:[#allocation5 + $0x80] sm:$0xff]
    %v715 = vld [vmem:[#allocation5 + $0x88] sm:$0xff]
    %v716 = vld [vmem:[#allocation5 + $0x90] sm:$0xff]
    %v717 = vld [vmem:[#allocation5 + $0x98] sm:$0xff]
    %v718 = vld [vmem:[#allocation5 + $0xa0] sm:$0xff]
    %v719 = vld [vmem:[#allocation5 + $0xa8] sm:$0xff]
    %v720 = vld [vmem:[#allocation5 + $0xb0] sm:$0xff]
    %v721 = vld [vmem:[#allocation5 + $0xb8] sm:$0xff]
    %v722 = vld [vmem:[#allocation5 + $0xc0] sm:$0xff]
    %v723 = vld [vmem:[#allocation5 + $0xc8] sm:$0xff]
    %v724 = vld [vmem:[#allocation5 + $0xd0] sm:$0xff]
    %v725 = vld [vmem:[#allocation5 + $0xd8] sm:$0xff]
    %v726 = vld [vmem:[#allocation5 + $0xe0] sm:$0xff]
    %v727 = vld [vmem:[#allocation5 + $0xe8] sm:$0xff]
    %v728 = vld [vmem:[#allocation5 + $0xf0] sm:$0xff]
    %v729 = vld [vmem:[#allocation5 + $0xf8] sm:$0xff]
    %v730 = vld [vmem:[%s6] sm:$0x3]
    %v732 = vlaneseq
    %v733 = vshrl.u32 %v732, 7
    %v734 = vsub.s32 0, %v733
    %v735 = vrot.slane %v730, %v734
    %v736 = vlaneseq
    %v737 = vshrl.u32 %v736, 7
    %v738 = vsub.s32 1, %v737
    %v739 = vrot.slane %v730, %v738
    %v774 = vunpack.c.l.b16 %v698
    %v775 = vunpack.c.h.b16 %v698
    %v776 = vunpack.c.l.b16 %v699
    %v777 = vunpack.c.h.b16 %v699
    %v778 = vunpack.c.l.b16 %v700
    %v779 = vunpack.c.h.b16 %v700
    %v780 = vunpack.c.l.b16 %v701
    %v781 = vunpack.c.h.b16 %v701
    %v782 = vunpack.c.l.b16 %v702
    %v783 = vunpack.c.h.b16 %v702
    %v784 = vunpack.c.l.b16 %v703
    %v785 = vunpack.c.h.b16 %v703
    %v786 = vunpack.c.l.b16 %v704
    %v787 = vunpack.c.h.b16 %v704
    %v788 = vunpack.c.l.b16 %v705
    %v789 = vunpack.c.h.b16 %v705
    %v790 = vunpack.c.l.b16 %v706
    %v791 = vunpack.c.h.b16 %v706
    %v792 = vunpack.c.l.b16 %v707
    %v793 = vunpack.c.h.b16 %v707
    %v794 = vunpack.c.l.b16 %v708
    %v795 = vunpack.c.h.b16 %v708
    %v796 = vunpack.c.l.b16 %v709
    %v797 = vunpack.c.h.b16 %v709
    %v798 = vunpack.c.l.b16 %v710
    %v799 = vunpack.c.h.b16 %v710
    %v800 = vunpack.c.l.b16 %v711
    %v801 = vunpack.c.h.b16 %v711
    %v802 = vunpack.c.l.b16 %v712
    %v803 = vunpack.c.h.b16 %v712
    %v804 = vunpack.c.l.b16 %v713
    %v805 = vunpack.c.h.b16 %v713
    %v806 = vunpack.c.l.b16 %v714
    %v807 = vunpack.c.h.b16 %v714
    %v808 = vunpack.c.l.b16 %v715
    %v809 = vunpack.c.h.b16 %v715
    %v810 = vunpack.c.l.b16 %v716
    %v811 = vunpack.c.h.b16 %v716
    %v812 = vunpack.c.l.b16 %v717
    %v813 = vunpack.c.h.b16 %v717
    %v814 = vunpack.c.l.b16 %v718
    %v815 = vunpack.c.h.b16 %v718
    %v816 = vunpack.c.l.b16 %v719
    %v817 = vunpack.c.h.b16 %v719
    %v818 = vunpack.c.l.b16 %v720
    %v819 = vunpack.c.h.b16 %v720
    %v820 = vunpack.c.l.b16 %v721
    %v821 = vunpack.c.h.b16 %v721
    %v822 = vunpack.c.l.b16 %v722
    %v823 = vunpack.c.h.b16 %v722
    %v824 = vunpack.c.l.b16 %v723
    %v825 = vunpack.c.h.b16 %v723
    %v826 = vunpack.c.l.b16 %v724
    %v827 = vunpack.c.h.b16 %v724
    %v828 = vunpack.c.l.b16 %v725
    %v829 = vunpack.c.h.b16 %v725
    %v830 = vunpack.c.l.b16 %v726
    %v831 = vunpack.c.h.b16 %v726
    %v832 = vunpack.c.l.b16 %v727
    %v833 = vunpack.c.h.b16 %v727
    %v834 = vunpack.c.l.b16 %v728
    %v835 = vunpack.c.h.b16 %v728
    %v836 = vunpack.c.l.b16 %v729
    %v837 = vunpack.c.h.b16 %v729
    %v838 = vpack.c.b16 %v776, %v774
    %v839 = vpack.c.b16 %v777, %v775
    %v840 = vpack.c.b16 %v780, %v778
    %v841 = vpack.c.b16 %v781, %v779
    %v842 = vpack.c.b16 %v784, %v782
    %v843 = vpack.c.b16 %v785, %v783
    %v844 = vpack.c.b16 %v788, %v786
    %v845 = vpack.c.b16 %v789, %v787
    %v846 = vpack.c.b16 %v792, %v790
    %v847 = vpack.c.b16 %v793, %v791
    %v848 = vpack.c.b16 %v796, %v794
    %v849 = vpack.c.b16 %v797, %v795
    %v850 = vpack.c.b16 %v800, %v798
    %v851 = vpack.c.b16 %v801, %v799
    %v852 = vpack.c.b16 %v804, %v802
    %v853 = vpack.c.b16 %v805, %v803
    %v854 = vpack.c.b16 %v808, %v806
    %v855 = vpack.c.b16 %v809, %v807
    %v856 = vpack.c.b16 %v812, %v810
    %v857 = vpack.c.b16 %v813, %v811
    %v858 = vpack.c.b16 %v816, %v814
    %v859 = vpack.c.b16 %v817, %v815
    %v860 = vpack.c.b16 %v820, %v818
    %v861 = vpack.c.b16 %v821, %v819
    %v862 = vpack.c.b16 %v824, %v822
    %v863 = vpack.c.b16 %v825, %v823
    %v864 = vpack.c.b16 %v828, %v826
    %v865 = vpack.c.b16 %v829, %v827
    %v866 = vpack.c.b16 %v832, %v830
    %v867 = vpack.c.b16 %v833, %v831
    %v868 = vpack.c.b16 %v836, %v834
    %v869 = vpack.c.b16 %v837, %v835
    %902 = vmatprep.subr.bf16.mxu0 %v853
    %903 = vmatpush1.bf16.msra.mxu0 %v852
    %904 = vmatprep.subr.bf16.mxu0 %v851
    %905 = vmatpush1.bf16.msra.mxu0 %v850
    %906 = vmatprep.subr.bf16.mxu0 %v849
    %907 = vmatpush1.bf16.msra.mxu0 %v848
    %908 = vmatprep.subr.bf16.mxu0 %v847
    %909 = vmatpush1.bf16.msra.mxu0 %v846
    %910 = vmatprep.subr.bf16.mxu0 %v845
    %911 = vmatpush1.bf16.msra.mxu0 %v844
    %912 = vmatprep.subr.bf16.mxu0 %v843
    %913 = vmatpush1.bf16.msra.mxu0 %v842
    %914 = vmatprep.subr.bf16.mxu0 %v841
    %915 = vmatpush1.bf16.msra.mxu0 %v840
    %916 = vmatprep.subr.bf16.mxu0 %v839
    %917 = vmatpush1.bf16.msra.mxu0 %v838
    %918 = vmatprep.subr.bf16.mxu0 %v869
    %919 = vmatpush2.bf16.msra.mxu0 %v868
    %920 = vmatprep.subr.bf16.mxu0 %v867
    %921 = vmatpush2.bf16.msra.mxu0 %v866
    %922 = vmatprep.subr.bf16.mxu0 %v865
    %923 = vmatpush2.bf16.msra.mxu0 %v864
    %924 = vmatprep.subr.bf16.mxu0 %v863
    %925 = vmatpush2.bf16.msra.mxu0 %v862
    %926 = vmatprep.subr.bf16.mxu0 %v861
    %927 = vmatpush2.bf16.msra.mxu0 %v860
    %928 = vmatprep.subr.bf16.mxu0 %v859
    %929 = vmatpush2.bf16.msra.mxu0 %v858
    %930 = vmatprep.subr.bf16.mxu0 %v857
    %931 = vmatpush2.bf16.msra.mxu0 %v856
    %932 = vmatprep.subr.bf16.mxu0 %v855
    %933 = vmatpush2.bf16.msra.mxu0 %v854
    %934 = vmatprep.mubr.bf16.mxu0 %v693
    %935 = vmatmul.mubr.bf16.gmra.mxu0 %v692
    %v936 = vpop.f32.mrf.mxu0
    %v937 = vadd.f32 %v735, %v936
    %v938 = vpop.f32.mrf.mxu0
    %v939 = vadd.f32 %v739, %v938
    %v940 = vpop.f32.mrf.mxu0
    %v941 = vadd.f32 %v735, %v940
    %v942 = vpop.f32.mrf.mxu0
    %v943 = vadd.f32 %v739, %v942
    %944 = vmatprep.mubr.bf16.mxu0 %v695
    %945 = vmatmul.mubr.bf16.gmra.mxu0 %v694
    %v946 = vpop.f32.mrf.mxu0
    %v947 = vadd.f32 %v735, %v946
    %v948 = vpop.f32.mrf.mxu0
    %v949 = vadd.f32 %v739, %v948
    %v950 = vpop.f32.mrf.mxu0
    %v951 = vadd.f32 %v735, %v950
    %v952 = vpop.f32.mrf.mxu0
    %v953 = vadd.f32 %v739, %v952
    %954 = vmatprep.mubr.bf16.mxu0 %v697
    %955 = vmatmul.mubr.bf16.gmra.mxu0 %v696
    %v956 = vpop.f32.mrf.mxu0
    %v957 = vadd.f32 %v735, %v956
    %v958 = vpop.f32.mrf.mxu0
    %v959 = vadd.f32 %v739, %v958
    %v960 = vpop.f32.mrf.mxu0
    %v961 = vadd.f32 %v735, %v960
    %v962 = vpop.f32.mrf.mxu0
    %v963 = vadd.f32 %v739, %v962
    %964 = vdwg.mxu0
    %v965 = vtanh.pop %v937
    %v966 = vtanh.pop %v939
    %v967 = vtanh.pop %v941
    %v968 = vtanh.pop %v943
    %v969 = vtanh.pop %v947
    %v970 = vtanh.pop %v949
    %v971 = vtanh.pop %v951
    %v972 = vtanh.pop %v953
    %v973 = vtanh.pop %v957
    %v974 = vtanh.pop %v959
    %v975 = vtanh.pop %v961
    %v976 = vtanh.pop %v963
    %v977 = vadd.f32 %v965, %v967
    %v978 = vadd.f32 %v977, %v969
    %v979 = vadd.f32 %v978, %v971
    %v980 = vadd.f32 %v979, %v973
    %v981 = vadd.f32 %v980, %v975
    %v982 = vrot.slane %v981, 4
    %v983 = vadd.f32 %v981, %v982
    %v984 = vrot.slane %v983, 2
    %v985 = vadd.f32 %v983, %v984
    %v986 = vrot.slane %v985, 1
    %v987 = vadd.f32 %v985, %v986
    %v988 = vadd.f32 %v966, %v968
    %v989 = vadd.f32 %v988, %v970
    %v990 = vadd.f32 %v989, %v972
    %v991 = vadd.f32 %v990, %v974
    %v992 = vadd.f32 %v991, %v976
    %v993 = vrot.slane %v992, 4
    %v994 = vadd.f32 %v992, %v993
    %v995 = vrot.slane %v994, 2
    %v996 = vadd.f32 %v994, %v995
    %v997 = vrot.slane %v996, 1
    %v998 = vadd.f32 %v996, %v997
    %v999 = vmul.f32 %v987, %v240
    %v1000 = vmul.f32 %v998, %v240
    %v1001 = vmul.f32 %v965, %v965
    %v1002 = vmul.f32 %v966, %v966
    %v1003 = vmul.f32 %v967, %v967
    %v1004 = vmul.f32 %v968, %v968
    %v1005 = vmul.f32 %v969, %v969
    %v1006 = vmul.f32 %v970, %v970
    %v1007 = vmul.f32 %v971, %v971
    %v1008 = vmul.f32 %v972, %v972
    %v1009 = vmul.f32 %v973, %v973
    %v1010 = vmul.f32 %v974, %v974
    %v1011 = vmul.f32 %v975, %v975
    %v1012 = vmul.f32 %v976, %v976
    %v1013 = vadd.f32 %v1001, %v1003
    %v1014 = vadd.f32 %v1013, %v1005
    %v1015 = vadd.f32 %v1014, %v1007
    %v1016 = vadd.f32 %v1015, %v1009
    %v1017 = vadd.f32 %v1016, %v1011
    %v1018 = vrot.slane %v1017, 4
    %v1019 = vadd.f32 %v1017, %v1018
    %v1020 = vrot.slane %v1019, 2
    %v1021 = vadd.f32 %v1019, %v1020
    %v1022 = vrot.slane %v1021, 1
    %v1023 = vadd.f32 %v1021, %v1022
    %v1024 = vadd.f32 %v1002, %v1004
    %v1025 = vadd.f32 %v1024, %v1006
    %v1026 = vadd.f32 %v1025, %v1008
    %v1027 = vadd.f32 %v1026, %v1010
    %v1028 = vadd.f32 %v1027, %v1012
    %v1029 = vrot.slane %v1028, 4
    %v1030 = vadd.f32 %v1028, %v1029
    %v1031 = vrot.slane %v1030, 2
    %v1032 = vadd.f32 %v1030, %v1031
    %v1033 = vrot.slane %v1032, 1
    %v1034 = vadd.f32 %v1032, %v1033
    %v1035 = vmul.f32 %v1023, %v240
    %v1036 = vmul.f32 %v1034, %v240
    %v1037 = vmul.f32 %v999, %v999
    %v1038 = vmul.f32 %v1000, %v1000
    %v1039 = vsub.f32 %v1035, %v1037
    %v1040 = vsub.f32 %v1036, %v1038
    %v1041 = vmax.f32 %v1039, 0.0
    %v1042 = vmax.f32 %v1040, 0.0
    %v1043 = vsub.f32 %v965, %v999
    %v1044 = vsub.f32 %v966, %v1000
    %v1045 = vsub.f32 %v967, %v999
    %v1046 = vsub.f32 %v968, %v1000
    %v1047 = vsub.f32 %v969, %v999
    %v1048 = vsub.f32 %v970, %v1000
    %v1049 = vsub.f32 %v971, %v999
    %v1050 = vsub.f32 %v972, %v1000
    %v1051 = vsub.f32 %v973, %v999
    %v1052 = vsub.f32 %v974, %v1000
    %v1053 = vsub.f32 %v975, %v999
    %v1054 = vsub.f32 %v976, %v1000
    %v1055 = vadd.f32 %v1041, 1e-05
    %v1056 = vadd.f32 %v1042, 1e-05
    %v1057 = vrsqrt.pop %v1055
    %v1058 = vrsqrt.pop %v1056
    %v1059 = vmul.f32 %v1043, %v1057
    %v1060 = vmul.f32 %v1044, %v1058
    %v1061 = vmul.f32 %v1045, %v1057
    %v1062 = vmul.f32 %v1046, %v1058
    %v1063 = vmul.f32 %v1047, %v1057
    %v1064 = vmul.f32 %v1048, %v1058
    %v1065 = vmul.f32 %v1049, %v1057
    %v1066 = vmul.f32 %v1050, %v1058
    %v1067 = vmul.f32 %v1051, %v1057
    %v1068 = vmul.f32 %v1052, %v1058
    %v1069 = vmul.f32 %v1053, %v1057
    %v1070 = vmul.f32 %v1054, %v1058
    %v1071 = vpack.c.bf16 %v1061, %v1059
    %v1072 = vpack.c.bf16 %v1062, %v1060
    %v1073 = vpack.c.bf16 %v1065, %v1063
    %v1074 = vpack.c.bf16 %v1066, %v1064
    %v1075 = vpack.c.bf16 %v1069, %v1067
    %v1076 = vpack.c.bf16 %v1070, %v1068
    %v1077 = vld [vmem:[#allocation7] sm:$0xf]
    %v1078 = vld [vmem:[#allocation7 + $0x4] sm:$0xf]
    %v1079 = vld [vmem:[#allocation7 + $0x8] sm:$0xf]
    %v1080 = vld [vmem:[#allocation7 + $0xc] sm:$0xf]
    %v1081 = vld [vmem:[#allocation7 + $0x10] sm:$0xf]
    %v1082 = vld [vmem:[#allocation7 + $0x14] sm:$0xf]
    %v1083 = vld [vmem:[#allocation7 + $0x18] sm:$0xf]
    %v1084 = vld [vmem:[#allocation7 + $0x1c] sm:$0xf]
    %v1085 = vld [vmem:[#allocation7 + $0x20] sm:$0xf]
    %v1086 = vld [vmem:[#allocation7 + $0x24] sm:$0xf]
    %v1087 = vld [vmem:[#allocation7 + $0x28] sm:$0xf]
    %v1088 = vld [vmem:[#allocation7 + $0x2c] sm:$0xf]
    %v1089 = vld [vmem:[#allocation7 + $0x30] sm:$0xf]
    %v1090 = vld [vmem:[#allocation7 + $0x34] sm:$0xf]
    %v1091 = vld [vmem:[#allocation7 + $0x38] sm:$0xf]
    %v1092 = vld [vmem:[#allocation7 + $0x3c] sm:$0xf]
    %v1093 = vld [vmem:[#allocation7 + $0x40] sm:$0xf]
    %v1094 = vld [vmem:[#allocation7 + $0x44] sm:$0xf]
    %v1095 = vld [vmem:[#allocation7 + $0x48] sm:$0xf]
    %v1096 = vld [vmem:[#allocation7 + $0x4c] sm:$0xf]
    %v1097 = vld [vmem:[#allocation7 + $0x50] sm:$0xf]
    %v1098 = vld [vmem:[#allocation7 + $0x54] sm:$0xf]
    %v1099 = vld [vmem:[#allocation7 + $0x58] sm:$0xf]
    %v1100 = vld [vmem:[#allocation7 + $0x5c] sm:$0xf]
    %v1101 = vld [vmem:[#allocation7 + $0x60] sm:$0xf]
    %v1102 = vld [vmem:[#allocation7 + $0x64] sm:$0xf]
    %v1103 = vld [vmem:[#allocation7 + $0x68] sm:$0xf]
    %v1104 = vld [vmem:[#allocation7 + $0x6c] sm:$0xf]
    %v1105 = vld [vmem:[#allocation7 + $0x70] sm:$0xf]
    %v1106 = vld [vmem:[#allocation7 + $0x74] sm:$0xf]
    %v1107 = vld [vmem:[#allocation7 + $0x78] sm:$0xf]
    %v1108 = vld [vmem:[#allocation7 + $0x7c] sm:$0xf]
    %v1109 = vld [vmem:[%s8] sm:$0x1]
    %v1111 = vlaneseq
    %v1112 = vshrl.u32 %v1111, 7
    %v1113 = vsub.s32 0, %v1112
    %v1114 = vrot.slane %v1109, %v1113
    %v1148 = vunpack.c.l.b16 %v1077
    %v1149 = vunpack.c.l.b16 %v1078
    %v1150 = vunpack.c.l.b16 %v1079
    %v1151 = vunpack.c.l.b16 %v1080
    %v1152 = vunpack.c.l.b16 %v1081
    %v1153 = vunpack.c.l.b16 %v1082
    %v1154 = vunpack.c.l.b16 %v1083
    %v1155 = vunpack.c.l.b16 %v1084
    %v1156 = vunpack.c.l.b16 %v1085
    %v1157 = vunpack.c.l.b16 %v1086
    %v1158 = vunpack.c.l.b16 %v1087
    %v1159 = vunpack.c.l.b16 %v1088
    %v1160 = vunpack.c.l.b16 %v1089
    %v1161 = vunpack.c.l.b16 %v1090
    %v1162 = vunpack.c.l.b16 %v1091
    %v1163 = vunpack.c.l.b16 %v1092
    %v1164 = vunpack.c.l.b16 %v1093
    %v1165 = vunpack.c.l.b16 %v1094
    %v1166 = vunpack.c.l.b16 %v1095
    %v1167 = vunpack.c.l.b16 %v1096
    %v1168 = vunpack.c.l.b16 %v1097
    %v1169 = vunpack.c.l.b16 %v1098
    %v1170 = vunpack.c.l.b16 %v1099
    %v1171 = vunpack.c.l.b16 %v1100
    %v1172 = vunpack.c.l.b16 %v1101
    %v1173 = vunpack.c.l.b16 %v1102
    %v1174 = vunpack.c.l.b16 %v1103
    %v1175 = vunpack.c.l.b16 %v1104
    %v1176 = vunpack.c.l.b16 %v1105
    %v1177 = vunpack.c.l.b16 %v1106
    %v1178 = vunpack.c.l.b16 %v1107
    %v1179 = vunpack.c.l.b16 %v1108
    %v1180 = vpack.c.b16 %v1149, %v1148
    %v1181 = vpack.c.b16 %v1151, %v1150
    %v1182 = vpack.c.b16 %v1153, %v1152
    %v1183 = vpack.c.b16 %v1155, %v1154
    %v1184 = vpack.c.b16 %v1157, %v1156
    %v1185 = vpack.c.b16 %v1159, %v1158
    %v1186 = vpack.c.b16 %v1161, %v1160
    %v1187 = vpack.c.b16 %v1163, %v1162
    %v1188 = vpack.c.b16 %v1165, %v1164
    %v1189 = vpack.c.b16 %v1167, %v1166
    %v1190 = vpack.c.b16 %v1169, %v1168
    %v1191 = vpack.c.b16 %v1171, %v1170
    %v1192 = vpack.c.b16 %v1173, %v1172
    %v1193 = vpack.c.b16 %v1175, %v1174
    %v1194 = vpack.c.b16 %v1177, %v1176
    %v1195 = vpack.c.b16 %v1179, %v1178
    %1212 = vmatprep.subr.bf16.mxu0 0
    %1213 = vmatpush1.bf16.msra.mxu0 %v1187
    %1214 = vmatprep.subr.bf16.mxu0 0
    %1215 = vmatpush1.bf16.msra.mxu0 %v1186
    %1216 = vmatprep.subr.bf16.mxu0 0
    %1217 = vmatpush1.bf16.msra.mxu0 %v1185
    %1218 = vmatprep.subr.bf16.mxu0 0
    %1219 = vmatpush1.bf16.msra.mxu0 %v1184
    %1220 = vmatprep.subr.bf16.mxu0 0
    %1221 = vmatpush1.bf16.msra.mxu0 %v1183
    %1222 = vmatprep.subr.bf16.mxu0 0
    %1223 = vmatpush1.bf16.msra.mxu0 %v1182
    %1224 = vmatprep.subr.bf16.mxu0 0
    %1225 = vmatpush1.bf16.msra.mxu0 %v1181
    %1226 = vmatprep.subr.bf16.mxu0 0
    %1227 = vmatpush1.bf16.msra.mxu0 %v1180
    %1228 = vmatprep.subr.bf16.mxu0 0
    %1229 = vmatpush2.bf16.msra.mxu0 %v1195
    %1230 = vmatprep.subr.bf16.mxu0 0
    %1231 = vmatpush2.bf16.msra.mxu0 %v1194
    %1232 = vmatprep.subr.bf16.mxu0 0
    %1233 = vmatpush2.bf16.msra.mxu0 %v1193
    %1234 = vmatprep.subr.bf16.mxu0 0
    %1235 = vmatpush2.bf16.msra.mxu0 %v1192
    %1236 = vmatprep.subr.bf16.mxu0 0
    %1237 = vmatpush2.bf16.msra.mxu0 %v1191
    %1238 = vmatprep.subr.bf16.mxu0 0
    %1239 = vmatpush2.bf16.msra.mxu0 %v1190
    %1240 = vmatprep.subr.bf16.mxu0 0
    %1241 = vmatpush2.bf16.msra.mxu0 %v1189
    %1242 = vmatprep.subr.bf16.mxu0 0
    %1243 = vmatpush2.bf16.msra.mxu0 %v1188
    %1244 = vmatprep.mubr.bf16.mxu0 %v1072
    %1245 = vmatmul.mubr.bf16.gmra.mxu0 %v1071
    %v1246 = vpop.f32.mrf.mxu0
    %v1247 = vadd.f32 %v1114, %v1246
    %v1248 = vpop.f32.mrf.mxu0
    %v1249 = vpop.f32.mrf.mxu0
    %v1250 = vadd.f32 %v1114, %v1249
    %v1251 = vpop.f32.mrf.mxu0
    %1252 = vmatprep.mubr.bf16.mxu0 %v1074
    %1253 = vmatmul.mubr.bf16.gmra.mxu0 %v1073
    %v1254 = vpop.f32.mrf.mxu0
    %v1255 = vadd.f32 %v1114, %v1254
    %v1256 = vpop.f32.mrf.mxu0
    %v1257 = vpop.f32.mrf.mxu0
    %v1258 = vadd.f32 %v1114, %v1257
    %v1259 = vpop.f32.mrf.mxu0
    %1260 = vmatprep.mubr.bf16.mxu0 %v1076
    %1261 = vmatmul.mubr.bf16.gmra.mxu0 %v1075
    %v1262 = vpop.f32.mrf.mxu0
    %v1263 = vadd.f32 %v1114, %v1262
    %v1264 = vpop.f32.mrf.mxu0
    %v1265 = vpop.f32.mrf.mxu0
    %v1266 = vadd.f32 %v1114, %v1265
    %v1267 = vpop.f32.mrf.mxu0
    %1268 = vdwg.mxu0
    %1269 = vst [vmem:[#allocation8] sm:$0xff] %v1247
    %1270 = vst [vmem:[#allocation8 + $0x8] sm:$0xff] %v1250
    %1271 = vst [vmem:[#allocation8 + $0x10] sm:$0xff] %v1255
    %1272 = vst [vmem:[#allocation8 + $0x18] sm:$0xff] %v1258
    %1273 = vst [vmem:[#allocation8 + $0x20] sm:$0xff] %v1263
    %1274 = vst [vmem:[#allocation8 + $0x28] sm:$0xff] %v1266
    // Predicated region
    $region50: #{tpu_custom_call.1} parent=1 // pred_check
      _
    $region51: #{tpu_custom_call.1} parent=1 // pred_check_branch
      %1276 = sbr.rel (0) target = $region53
    $region52: #{tpu_custom_call.1} parent=1 // pred_region
      %s1278 = ssub.s32 768, 768
      %1279 = vsyncadd [#allocation4], %s1278
      %s1280 = sshll.u32 [#allocation8], 4
      %s1281 = int_to_ptr.vmem [resolvable:$true] %s1280
      %1286 = dma.vmem_to_hbm [thread:$0]  %s1281, 768, %s9, [#allocation4], 128, 128, 8
    $region53: #{tpu_custom_call.1} parent=1 // pred_fallthru
      _
    // Predicated region
    $region54: #{tpu_custom_call.1} parent=1 // pred_check
      _
    $region55: #{tpu_custom_call.1} parent=1 // pred_check_branch
      %1288 = sbr.rel (0) target = $region57
    $region56: #{tpu_custom_call.1} parent=1 // pred_region
      %1289 = dma.done [#allocation4], 768
    $region57: #{tpu_custom_call.1} parent=1 // pred_fallthru
      _
    %1290 = vsyncpa [#allocation3], 1
    %1291 = vsyncpa [#allocation6], 1
    %1292 = vsyncpa [#allocation4], 1

</llo_original>
